<compile_context>
chip_gen: v6e
topology: v6e:2x2x1
jax: 0.10.0
libtpu: 0.0.40
codegen_flags: <defaults>
</compile_context>

<pallas_src>
import functools

import jax
import jax.numpy as jnp
from jax.experimental import pallas as pl
from jax.experimental.pallas import tpu as pltpu

LANE = 128


def _make_mlp_kernel(compute_dtype):
    def mlp_kernel(x_ref, w1_ref, w2_ref, w3_ref, o_ref):
        # Each w*_ref has its bias folded in as the LAST row:
        #   rows [0:fan_in]  -> W  (fan_in, fan_out)
        #   row  [fan_in]    -> b  (1, fan_out)      (kept in f32)
        in_dim = w1_ref.shape[0] - 1
        hid = w2_ref.shape[0] - 1

        x = x_ref[...].astype(compute_dtype)

        # layer 1: Linear + ReLU  (MXU matmul, f32 accumulation; bias/ReLU in f32)
        h1 = jnp.dot(x, w1_ref[:in_dim, :].astype(compute_dtype),
                     preferred_element_type=jnp.float32)
        h1 = jnp.maximum(h1 + w1_ref[in_dim:in_dim + 1, :], 0.0)

        # layer 2: Linear + ReLU
        h2 = jnp.dot(h1.astype(compute_dtype), w2_ref[:hid, :].astype(compute_dtype),
                     preferred_element_type=jnp.float32)
        h2 = jnp.maximum(h2 + w2_ref[hid:hid + 1, :], 0.0)

        # layer 3: Linear (no activation); output columns are lane-padded.
        out = jnp.dot(h2.astype(compute_dtype), w3_ref[:hid, :].astype(compute_dtype),
                      preferred_element_type=jnp.float32)
        o_ref[...] = (out + w3_ref[hid:hid + 1, :]).astype(o_ref.dtype)

    return mlp_kernel


def pack_params(params):
    """Fold each bias into its weight (extra last row) and pad the output layer
    to a lane-dense width (multiple of 128).  Call ONCE, outside the hot loop."""
    def fold(w, b):
        return jnp.concatenate([w, b.reshape(1, -1)], axis=0)

    out_dim = params["w3"].shape[1]
    out_pad = max(LANE, ((out_dim + LANE - 1) // LANE) * LANE)
    w3 = fold(params["w3"], params["b3"])
    if out_pad != out_dim:
        w3 = jnp.pad(w3, ((0, 0), (0, out_pad - out_dim)))
    return {
        "w1": fold(params["w1"], params["b1"]),
        "w2": fold(params["w2"], params["b2"]),
        "w3": w3,
    }


@functools.partial(jax.jit, static_argnames=("out_dim", "block_b", "compute_dtype"))
def network_forward(x, packed, *, out_dim, block_b=128, compute_dtype=jnp.float32):
    """x: (B, in_dim) f32.  packed: output of pack_params()."""
    w1, w2, w3 = packed["w1"], packed["w2"], packed["w3"]
    B, in_dim = x.shape
    out_pad = w3.shape[1]

    tb = min(B, block_b)                 # batch tile (== B for small batches)
    grid = (pl.cdiv(B, tb),)

    def resident(w):                     # weights: same block every grid step
        return pl.BlockSpec(w.shape, lambda i: (0, 0))

    out = pl.pallas_call(
        _make_mlp_kernel(compute_dtype),
        out_shape=jax.ShapeDtypeStruct((B, out_pad), jnp.float32),
        grid=grid,
        in_specs=[
            pl.BlockSpec((tb, in_dim), lambda i: (i, 0)),   # batch-tiled activations
            resident(w1), resident(w2), resident(w3),       # VMEM-resident weights
        ],
        out_specs=pl.BlockSpec((tb, out_pad), lambda i: (i, 0)),
        compiler_params=pltpu.CompilerParams(
            dimension_semantics=("parallel",)),             # megacore / v7x dual-TC
    )(x, w1, w2, w3)
    return out[:, :out_dim]


def init_params(key, in_dim, out_dim, hidden=128):
    """Deterministic init mimicking PyTorch nn.Linear default (U(-1/sqrt(fan_in), +))."""
    ks = jax.random.split(key, 6)

    def linear(kw, kb, fan_in, fan_out):
        bound = 1.0 / jnp.sqrt(fan_in)
        w = jax.random.uniform(kw, (fan_in, fan_out), jnp.float32, -bound, bound)
        b = jax.random.uniform(kb, (1, fan_out), jnp.float32, -bound, bound)
        return w, b

    w1, b1 = linear(ks[0], ks[1], in_dim, hidden)
    w2, b2 = linear(ks[2], ks[3], hidden, hidden)
    w3, b3 = linear(ks[4], ks[5], hidden, out_dim)
    return dict(w1=w1, b1=b1, w2=w2, b2=b2, w3=w3, b3=b3)


def reference_forward(x, p):
    h1 = jnp.maximum(x @ p["w1"] + p["b1"], 0.0)
    h2 = jnp.maximum(h1 @ p["w2"] + p["b2"], 0.0)
    return h2 @ p["w3"] + p["b3"]


if __name__ == "__main__":
    # Typical snake DQN sizes: state vector of 16 features, 4 actions.
    B, IN_DIM, OUT_DIM, HIDDEN = 8, 16, 4, 128

    key = jax.random.PRNGKey(0)
    kx, kp, kx2 = jax.random.split(key, 3)
    params = init_params(kp, IN_DIM, OUT_DIM, HIDDEN)
    packed = pack_params(params)

    # 1) Small inference-style batch, full-precision path (single grid step).
    x = jax.random.normal(kx, (B, IN_DIM), jnp.float32)
    out = jax.block_until_ready(network_forward(x, packed, out_dim=OUT_DIM))
    ref = reference_forward(x, params)
    assert out.shape == (B, OUT_DIM), out.shape
    assert jnp.allclose(out, ref, atol=1e-4, rtol=1e-4), "f32 mismatch vs reference"

    # 2) Training-style batch: exercises the batch grid axis (grid > 1) and the
    #    bf16-operand MXU path (f32 accumulation kept).
    B2 = 256
    x2 = jax.random.normal(kx2, (B2, IN_DIM), jnp.float32)
    out2 = jax.block_until_ready(
        network_forward(x2, packed, out_dim=OUT_DIM, compute_dtype=jnp.bfloat16))
    ref2 = reference_forward(x2, params)
    assert out2.shape == (B2, OUT_DIM), out2.shape
    err = jnp.max(jnp.abs(out2 - ref2))
    assert err < 1e-1, f"bf16 mismatch vs reference (max abs err {err})"

    print("KERNEL_OK")
</pallas_src>

<mosaic_0001>
module attributes {stable_mosaic.version = 11 : i64} {
  func.func @mlp_kernel(%arg0: i32, %arg1: memref<8x16xf32, #tpu.memory_space<vmem>>, %arg2: memref<17x128xf32, #tpu.memory_space<vmem>>, %arg3: memref<129x128xf32, #tpu.memory_space<vmem>>, %arg4: memref<129x128xf32, #tpu.memory_space<vmem>>, %arg5: memref<8x128xf32, #tpu.memory_space<vmem>>) attributes {dimension_semantics = [#tpu.dimension_semantics<parallel>], iteration_bounds = array<i64: 1>, scalar_prefetch = 0 : i64, scratch_operands = 0 : i64, tpu.core_type = #tpu.core_type<tc>, window_params = [{transform_indices = @transform_0, window_bounds = array<i64: 8, 16>}, {pipeline_mode = #tpu.pipeline_mode<synchronous>, transform_indices = @transform_1, window_bounds = array<i64: 17, 128>}, {pipeline_mode = #tpu.pipeline_mode<synchronous>, transform_indices = @transform_2, window_bounds = array<i64: 129, 128>}, {pipeline_mode = #tpu.pipeline_mode<synchronous>, transform_indices = @transform_3, window_bounds = array<i64: 129, 128>}, {transform_indices = @transform_4, window_bounds = array<i64: 8, 128>}]} {
    %c0 = arith.constant 0 : index
    %c0_0 = arith.constant 0 : index
    %0 = vector.load %arg1[%c0, %c0_0] : memref<8x16xf32, #tpu.memory_space<vmem>>, vector<8x16xf32>
    %c0_1 = arith.constant 0 : index
    %c0_2 = arith.constant 0 : index
    %1 = vector.load %arg2[%c0_1, %c0_2] : memref<17x128xf32, #tpu.memory_space<vmem>>, vector<16x128xf32>
    %cst = arith.constant dense<0.000000e+00> : vector<8x128xf32>
    %2 = tpu.matmul %0, %1, %cst {dimension_numbers = #tpu.dot_dimension_numbers<[1], [0], [0], [1], [0, 0, 1, 1], [], []>} : vector<8x16xf32>, vector<16x128xf32>, vector<8x128xf32> -> vector<8x128xf32>
    %c16 = arith.constant 16 : index
    %c0_3 = arith.constant 0 : index
    %3 = vector.load %arg2[%c16, %c0_3] : memref<17x128xf32, #tpu.memory_space<vmem>>, vector<1x128xf32>
    %4 = vector.broadcast %3 : vector<1x128xf32> to vector<8x128xf32>
    %5 = arith.addf %2, %4 : vector<8x128xf32>
    %cst_4 = arith.constant 0.000000e+00 : f32
    %6 = vector.broadcast %cst_4 : f32 to vector<8x128xf32>
    %7 = arith.maximumf %5, %6 : vector<8x128xf32>
    %c0_5 = arith.constant 0 : index
    %c0_6 = arith.constant 0 : index
    %8 = vector.load %arg3[%c0_5, %c0_6] : memref<129x128xf32, #tpu.memory_space<vmem>>, vector<128x128xf32>
    %cst_7 = arith.constant dense<0.000000e+00> : vector<8x128xf32>
    %9 = tpu.matmul %7, %8, %cst_7 {dimension_numbers = #tpu.dot_dimension_numbers<[1], [0], [0], [1], [0, 0, 1, 1], [], []>} : vector<8x128xf32>, vector<128x128xf32>, vector<8x128xf32> -> vector<8x128xf32>
    %c128 = arith.constant 128 : index
    %c0_8 = arith.constant 0 : index
    %10 = vector.load %arg3[%c128, %c0_8] : memref<129x128xf32, #tpu.memory_space<vmem>>, vector<1x128xf32>
    %11 = vector.broadcast %10 : vector<1x128xf32> to vector<8x128xf32>
    %12 = arith.addf %9, %11 : vector<8x128xf32>
    %cst_9 = arith.constant 0.000000e+00 : f32
    %13 = vector.broadcast %cst_9 : f32 to vector<8x128xf32>
    %14 = arith.maximumf %12, %13 : vector<8x128xf32>
    %c0_10 = arith.constant 0 : index
    %c0_11 = arith.constant 0 : index
    %15 = vector.load %arg4[%c0_10, %c0_11] : memref<129x128xf32, #tpu.memory_space<vmem>>, vector<128x128xf32>
    %cst_12 = arith.constant dense<0.000000e+00> : vector<8x128xf32>
    %16 = tpu.matmul %14, %15, %cst_12 {dimension_numbers = #tpu.dot_dimension_numbers<[1], [0], [0], [1], [0, 0, 1, 1], [], []>} : vector<8x128xf32>, vector<128x128xf32>, vector<8x128xf32> -> vector<8x128xf32>
    %c128_13 = arith.constant 128 : index
    %c0_14 = arith.constant 0 : index
    %17 = vector.load %arg4[%c128_13, %c0_14] : memref<129x128xf32, #tpu.memory_space<vmem>>, vector<1x128xf32>
    %18 = vector.broadcast %17 : vector<1x128xf32> to vector<8x128xf32>
    %19 = arith.addf %16, %18 : vector<8x128xf32>
    %c0_15 = arith.constant 0 : index
    %c0_16 = arith.constant 0 : index
    %20 = vector.load %arg5[%c0_15, %c0_16] : memref<8x128xf32, #tpu.memory_space<vmem>>, vector<8x128xf32>
    tpu.vector_store %arg5[%c0_15, %c0_16], %19 {strides = array<i32>} : memref<8x128xf32, #tpu.memory_space<vmem>>, vector<8x128xf32>,
    return
  }
  func.func @transform_0(%arg0: i32) -> (i32, i32) {
    %c0_i32 = arith.constant 0 : i32
    %c0_i32_0 = arith.constant 0 : i32
    return %arg0, %c0_i32 : i32, i32
  }
  func.func @transform_1(%arg0: i32) -> (i32, i32) {
    %c0_i32 = arith.constant 0 : i32
    %c0_i32_0 = arith.constant 0 : i32
    %c0_i32_1 = arith.constant 0 : i32
    return %c0_i32, %c0_i32_0 : i32, i32
  }
  func.func @transform_2(%arg0: i32) -> (i32, i32) {
    %c0_i32 = arith.constant 0 : i32
    %c0_i32_0 = arith.constant 0 : i32
    %c0_i32_1 = arith.constant 0 : i32
    return %c0_i32, %c0_i32_0 : i32, i32
  }
  func.func @transform_3(%arg0: i32) -> (i32, i32) {
    %c0_i32 = arith.constant 0 : i32
    %c0_i32_0 = arith.constant 0 : i32
    %c0_i32_1 = arith.constant 0 : i32
    return %c0_i32, %c0_i32_0 : i32, i32
  }
  func.func @transform_4(%arg0: i32) -> (i32, i32) {
    %c0_i32 = arith.constant 0 : i32
    %c0_i32_0 = arith.constant 0 : i32
    return %arg0, %c0_i32 : i32, i32
  }
}

</mosaic_0001>

<llo_original>
// kernel: network_forward.1
$region0: #{network_forward.1}
  #allocation0 [shape = 'u32[]', space=smem, size = 0x4, offset = 0x4, fixed_abs, tag = 'smem constant byte address 0x4 - core index']
  #allocation1 [shape = 'u32[144,128]{1,0:T(1,128)}', space=vmem, size = 0x12000, scoped, tag = 'internal scratch']
  %s0 = inlined_call_operand.hbm [shape: f32[8,16], index: 0, kind: input, shape index: {}]
  %s1 = inlined_call_operand.hbm [shape: f32[17,128], index: 1, kind: input, shape index: {}]
  %s2 = inlined_call_operand.hbm [shape: f32[129,128], index: 2, kind: input, shape index: {}]
  %s3 = inlined_call_operand.hbm [shape: f32[129,128], index: 3, kind: input, shape index: {}]
  %s4 = inlined_call_operand.vmem [shape: f32[8,128], index: 4, kind: output, shape index: {}]
  %s5 = sld [smem:[#allocation0]]
  $region42: #{network_forward.1} parent=0
    _
  %s7 = ssub.s32 1, %s5
  %s8 = scalar_select 0, %s7, %s5
  $region1: #{network_forward.1} parent=0
    #allocation2 [shape = 'u8[4096]{0}', space=vmem, size = 0x1000, scoped, tag = 'input window, operand 0, single buffered']
    #allocation3 [shape = 's32[1]{0}', space=sflag, size = 0x4, scoped, tag = 'scoped memory for network_forward.1']
    #allocation4 [shape = 'u8[12288]{0}', space=vmem, size = 0x3000, scoped, tag = 'input window, operand 1, single buffered']
    #allocation5 [shape = 's32[1]{0}', space=sflag, size = 0x4, scoped, tag = 'scoped memory for network_forward.1']
    #allocation6 [shape = 'u8[69632]{0}', space=vmem, size = 0x11000, scoped, tag = 'input window, operand 2, single buffered']
    #allocation7 [shape = 'u8[69632]{0}', space=vmem, size = 0x11000, scoped, tag = 'input window, operand 3, single buffered']
    #allocation8 [shape = 's32[1]{0}', space=sflag, size = 0x4, scoped, tag = 'scoped memory for network_forward.1']
    %9 = vsyncpa [#allocation3], 0
    %10 = vsyncpa [#allocation5], 0
    %11 = vsyncpa [#allocation8], 0
    // Predicated region
    $region2: #{network_forward.1} parent=1 // pred_check
      _
    $region3: #{network_forward.1} parent=1 // pred_check_branch
      %13 = sbr.rel (0) target = $region5
    $region4: #{network_forward.1} parent=1 // pred_region
      %s15 = ssub.s32 128, 128
      %16 = vsyncadd [#allocation3], %s15
      %s18 = sshll.u32 [#allocation2], 4
      %s19 = int_to_ptr.vmem [resolvable:$true] %s18
      %21 = dma.hbm_to_vmem [thread:$0]  %s0, 128, %s19, [#allocation3]
    $region5: #{network_forward.1} parent=1 // pred_fallthru
      _
    // Predicated region
    $region6: #{network_forward.1} parent=1 // pred_check
      _
    $region7: #{network_forward.1} parent=1 // pred_check_branch
      %23 = sbr.rel (0) target = $region9
    $region8: #{network_forward.1} parent=1 // pred_region
      %s25 = ssub.s32 384, 384
      %26 = vsyncadd [#allocation5], %s25
      %s27 = sshll.u32 [#allocation4], 4
      %s28 = int_to_ptr.vmem [resolvable:$true] %s27
      %33 = dma.hbm_to_vmem [thread:$0]  %s1, 384, %s28, [#allocation5], 128, 128, 8
    $region9: #{network_forward.1} parent=1 // pred_fallthru
      _
    // Predicated region
    $region10: #{network_forward.1} parent=1 // pred_check
      _
    $region11: #{network_forward.1} parent=1 // pred_check_branch
      %35 = sbr.rel (0) target = $region13
    $region12: #{network_forward.1} parent=1 // pred_region
      %s37 = ssub.s32 2176, 2176
      %38 = vsyncadd [#allocation5], %s37
      %s39 = sshll.u32 [#allocation6], 4
      %s40 = int_to_ptr.vmem [resolvable:$true] %s39
      %45 = dma.hbm_to_vmem [thread:$0]  %s2, 2176, %s40, [#allocation5], 128, 128, 8
    $region13: #{network_forward.1} parent=1 // pred_fallthru
      _
    // Predicated region
    $region14: #{network_forward.1} parent=1 // pred_check
      _
    $region15: #{network_forward.1} parent=1 // pred_check_branch
      %47 = sbr.rel (0) target = $region17
    $region16: #{network_forward.1} parent=1 // pred_region
      %s49 = ssub.s32 2176, 2176
      %50 = vsyncadd [#allocation8], %s49
      %s51 = sshll.u32 [#allocation7], 4
      %s52 = int_to_ptr.vmem [resolvable:$true] %s51
      %57 = dma.hbm_to_vmem [thread:$0]  %s3, 2176, %s52, [#allocation8], 128, 128, 8
    $region17: #{network_forward.1} parent=1 // pred_fallthru
      _
    // Predicated region
    $region18: #{network_forward.1} parent=1 // pred_check
      _
    $region19: #{network_forward.1} parent=1 // pred_check_branch
      %59 = sbr.rel (0) target = $region21
    $region20: #{network_forward.1} parent=1 // pred_region
      %60 = dma.done [#allocation3], 128
    $region21: #{network_forward.1} parent=1 // pred_fallthru
      _
    // Predicated region
    $region22: #{network_forward.1} parent=1 // pred_check
      _
    $region23: #{network_forward.1} parent=1 // pred_check_branch
      %62 = sbr.rel (0) target = $region25
    $region24: #{network_forward.1} parent=1 // pred_region
      %63 = dma.done [#allocation5], 384
    $region25: #{network_forward.1} parent=1 // pred_fallthru
      _
    // Predicated region
    $region26: #{network_forward.1} parent=1 // pred_check
      _
    $region27: #{network_forward.1} parent=1 // pred_check_branch
      %65 = sbr.rel (0) target = $region29
    $region28: #{network_forward.1} parent=1 // pred_region
      %66 = dma.done [#allocation5], 2176
    $region29: #{network_forward.1} parent=1 // pred_fallthru
      _
    // Predicated region
    $region30: #{network_forward.1} parent=1 // pred_check
      _
    $region31: #{network_forward.1} parent=1 // pred_check_branch
      %68 = sbr.rel (0) target = $region33
    $region32: #{network_forward.1} parent=1 // pred_region
      %69 = dma.done [#allocation8], 2176
    $region33: #{network_forward.1} parent=1 // pred_fallthru
      _
    %v70 = vld [vmem:[#allocation2] sm:$0xff]
    %v71 = vld [vmem:[#allocation4] sm:$0xff]
    %v72 = vld [vmem:[#allocation4 + $0x8] sm:$0xff]
    %v73 = vld [vmem:[#allocation4 + $0x10] sm:$0x1]
    %v74 = vlaneseq
    %v75 = vshrl.u32 %v74, 7
    %v76 = vsub.s32 0, %v75
    %v77 = vrot.slane %v73, %v76
    %vm78 = vcmask 130048
    %v80 = vsel %vm78, %v70, 0
    %82 = vmatprep.subr.mxu0 0.0
    %83 = vmatpush1.msra.mxu0 0.0
    %84 = vmatprep.subr.mxu0 0.0
    %85 = vmatpush1.msra.mxu0 0.0
    %86 = vmatprep.subr.mxu0 0.0
    %87 = vmatpush1.msra.mxu0 0.0
    %88 = vmatprep.subr.mxu0 0.0
    %89 = vmatpush1.msra.mxu0 0.0
    %90 = vmatprep.subr.mxu0 0.0
    %91 = vmatpush1.msra.mxu0 0.0
    %92 = vmatprep.subr.mxu0 0.0
    %93 = vmatpush1.msra.mxu0 0.0
    %94 = vmatprep.subr.mxu0 0.0
    %95 = vmatpush1.msra.mxu0 0.0
    %96 = vmatprep.subr.mxu0 0.0
    %97 = vmatpush1.msra.mxu0 0.0
    %98 = vmatprep.subr.mxu0 0.0
    %99 = vmatpush1.msra.mxu0 0.0
    %100 = vmatprep.subr.mxu0 0.0
    %101 = vmatpush1.msra.mxu0 0.0
    %102 = vmatprep.subr.mxu0 0.0
    %103 = vmatpush1.msra.mxu0 0.0
    %104 = vmatprep.subr.mxu0 0.0
    %105 = vmatpush1.msra.mxu0 0.0
    %106 = vmatprep.subr.mxu0 0.0
    %107 = vmatpush1.msra.mxu0 0.0
    %108 = vmatprep.subr.mxu0 0.0
    %109 = vmatpush1.msra.mxu0 0.0
    %110 = vmatprep.subr.mxu0 0.0
    %111 = vmatpush1.msra.mxu0 %v72
    %112 = vmatprep.subr.mxu0 0.0
    %113 = vmatpush1.msra.mxu0 %v71
    %114 = vmatprep.subr.mxu0 0.0
    %115 = vmatpush2.msra.mxu0 0.0
    %116 = vmatprep.subr.mxu0 0.0
    %117 = vmatpush2.msra.mxu0 0.0
    %118 = vmatprep.subr.mxu0 0.0
    %119 = vmatpush2.msra.mxu0 0.0
    %120 = vmatprep.subr.mxu0 0.0
    %121 = vmatpush2.msra.mxu0 0.0
    %122 = vmatprep.subr.mxu0 0.0
    %123 = vmatpush2.msra.mxu0 0.0
    %124 = vmatprep.subr.mxu0 0.0
    %125 = vmatpush2.msra.mxu0 0.0
    %126 = vmatprep.subr.mxu0 0.0
    %127 = vmatpush2.msra.mxu0 0.0
    %128 = vmatprep.subr.mxu0 0.0
    %129 = vmatpush2.msra.mxu0 0.0
    %130 = vmatprep.subr.mxu0 0.0
    %131 = vmatpush2.msra.mxu0 0.0
    %132 = vmatprep.subr.mxu0 0.0
    %133 = vmatpush2.msra.mxu0 0.0
    %134 = vmatprep.subr.mxu0 0.0
    %135 = vmatpush2.msra.mxu0 0.0
    %136 = vmatprep.subr.mxu0 0.0
    %137 = vmatpush2.msra.mxu0 0.0
    %138 = vmatprep.subr.mxu0 0.0
    %139 = vmatpush2.msra.mxu0 0.0
    %140 = vmatprep.subr.mxu0 0.0
    %141 = vmatpush2.msra.mxu0 0.0
    %142 = vmatprep.subr.mxu0 0.0
    %143 = vmatpush2.msra.mxu0 0.0
    %144 = vmatprep.subr.mxu0 0.0
    %145 = vmatpush2.msra.mxu0 0.0
    %146 = vmatprep.mubr.f32.mxu0 0.0
    %147 = vmatmul.mubr.f32.gmra.mxu0 %v80
    %v148 = vpop.f32.mrf.mxu0
    %v149 = vadd.f32 %v77, %v148
    %v150 = vpop.f32.mrf.mxu0
    %151 = vdwg.mxu0
    %v152 = vmax.f32 %v149, 0.0
    %v153 = vld [vmem:[#allocation6] sm:$0xff]
    %v154 = vld [vmem:[#allocation6 + $0x8] sm:$0xff]
    %v155 = vld [vmem:[#allocation6 + $0x10] sm:$0xff]
    %v156 = vld [vmem:[#allocation6 + $0x18] sm:$0xff]
    %v157 = vld [vmem:[#allocation6 + $0x20] sm:$0xff]
    %v158 = vld [vmem:[#allocation6 + $0x28] sm:$0xff]
    %v159 = vld [vmem:[#allocation6 + $0x30] sm:$0xff]
    %v160 = vld [vmem:[#allocation6 + $0x38] sm:$0xff]
    %v161 = vld [vmem:[#allocation6 + $0x40] sm:$0xff]
    %v162 = vld [vmem:[#allocation6 + $0x48] sm:$0xff]
    %v163 = vld [vmem:[#allocation6 + $0x50] sm:$0xff]
    %v164 = vld [vmem:[#allocation6 + $0x58] sm:$0xff]
    %v165 = vld [vmem:[#allocation6 + $0x60] sm:$0xff]
    %v166 = vld [vmem:[#allocation6 + $0x68] sm:$0xff]
    %v167 = vld [vmem:[#allocation6 + $0x70] sm:$0xff]
    %v168 = vld [vmem:[#allocation6 + $0x78] sm:$0xff]
    %v169 = vld [vmem:[#allocation6 + $0x80] sm:$0x1]
    %v170 = vlaneseq
    %v171 = vshrl.u32 %v170, 7
    %v172 = vsub.s32 0, %v171
    %v173 = vrot.slane %v169, %v172
    %174 = vmatprep.subr.mxu0 0.0
    %175 = vmatpush1.msra.mxu0 %v168
    %176 = vmatprep.subr.mxu0 0.0
    %177 = vmatpush1.msra.mxu0 %v167
    %178 = vmatprep.subr.mxu0 0.0
    %179 = vmatpush1.msra.mxu0 %v166
    %180 = vmatprep.subr.mxu0 0.0
    %181 = vmatpush1.msra.mxu0 %v165
    %182 = vmatprep.subr.mxu0 0.0
    %183 = vmatpush1.msra.mxu0 %v164
    %184 = vmatprep.subr.mxu0 0.0
    %185 = vmatpush1.msra.mxu0 %v163
    %186 = vmatprep.subr.mxu0 0.0
    %187 = vmatpush1.msra.mxu0 %v162
    %188 = vmatprep.subr.mxu0 0.0
    %189 = vmatpush1.msra.mxu0 %v161
    %190 = vmatprep.subr.mxu0 0.0
    %191 = vmatpush1.msra.mxu0 %v160
    %192 = vmatprep.subr.mxu0 0.0
    %193 = vmatpush1.msra.mxu0 %v159
    %194 = vmatprep.subr.mxu0 0.0
    %195 = vmatpush1.msra.mxu0 %v158
    %196 = vmatprep.subr.mxu0 0.0
    %197 = vmatpush1.msra.mxu0 %v157
    %198 = vmatprep.subr.mxu0 0.0
    %199 = vmatpush1.msra.mxu0 %v156
    %200 = vmatprep.subr.mxu0 0.0
    %201 = vmatpush1.msra.mxu0 %v155
    %202 = vmatprep.subr.mxu0 0.0
    %203 = vmatpush1.msra.mxu0 %v154
    %204 = vmatprep.subr.mxu0 0.0
    %205 = vmatpush1.msra.mxu0 %v153
    %206 = vmatprep.subr.mxu0 0.0
    %207 = vmatpush2.msra.mxu0 0.0
    %208 = vmatprep.subr.mxu0 0.0
    %209 = vmatpush2.msra.mxu0 0.0
    %210 = vmatprep.subr.mxu0 0.0
    %211 = vmatpush2.msra.mxu0 0.0
    %212 = vmatprep.subr.mxu0 0.0
    %213 = vmatpush2.msra.mxu0 0.0
    %214 = vmatprep.subr.mxu0 0.0
    %215 = vmatpush2.msra.mxu0 0.0
    %216 = vmatprep.subr.mxu0 0.0
    %217 = vmatpush2.msra.mxu0 0.0
    %218 = vmatprep.subr.mxu0 0.0
    %219 = vmatpush2.msra.mxu0 0.0
    %220 = vmatprep.subr.mxu0 0.0
    %221 = vmatpush2.msra.mxu0 0.0
    %222 = vmatprep.subr.mxu0 0.0
    %223 = vmatpush2.msra.mxu0 0.0
    %224 = vmatprep.subr.mxu0 0.0
    %225 = vmatpush2.msra.mxu0 0.0
    %226 = vmatprep.subr.mxu0 0.0
    %227 = vmatpush2.msra.mxu0 0.0
    %228 = vmatprep.subr.mxu0 0.0
    %229 = vmatpush2.msra.mxu0 0.0
    %230 = vmatprep.subr.mxu0 0.0
    %231 = vmatpush2.msra.mxu0 0.0
    %232 = vmatprep.subr.mxu0 0.0
    %233 = vmatpush2.msra.mxu0 0.0
    %234 = vmatprep.subr.mxu0 0.0
    %235 = vmatpush2.msra.mxu0 0.0
    %236 = vmatprep.subr.mxu0 0.0
    %237 = vmatpush2.msra.mxu0 0.0
    %238 = vmatprep.mubr.f32.mxu0 0.0
    %239 = vmatmul.mubr.f32.gmra.mxu0 %v152
    %v240 = vpop.f32.mrf.mxu0
    %v241 = vadd.f32 %v173, %v240
    %v242 = vpop.f32.mrf.mxu0
    %243 = vdwg.mxu0
    %v244 = vmax.f32 %v241, 0.0
    %v245 = vld [vmem:[#allocation7] sm:$0xff]
    %v246 = vld [vmem:[#allocation7 + $0x8] sm:$0xff]
    %v247 = vld [vmem:[#allocation7 + $0x10] sm:$0xff]
    %v248 = vld [vmem:[#allocation7 + $0x18] sm:$0xff]
    %v249 = vld [vmem:[#allocation7 + $0x20] sm:$0xff]
    %v250 = vld [vmem:[#allocation7 + $0x28] sm:$0xff]
    %v251 = vld [vmem:[#allocation7 + $0x30] sm:$0xff]
    %v252 = vld [vmem:[#allocation7 + $0x38] sm:$0xff]
    %v253 = vld [vmem:[#allocation7 + $0x40] sm:$0xff]
    %v254 = vld [vmem:[#allocation7 + $0x48] sm:$0xff]
    %v255 = vld [vmem:[#allocation7 + $0x50] sm:$0xff]
    %v256 = vld [vmem:[#allocation7 + $0x58] sm:$0xff]
    %v257 = vld [vmem:[#allocation7 + $0x60] sm:$0xff]
    %v258 = vld [vmem:[#allocation7 + $0x68] sm:$0xff]
    %v259 = vld [vmem:[#allocation7 + $0x70] sm:$0xff]
    %v260 = vld [vmem:[#allocation7 + $0x78] sm:$0xff]
    %v261 = vld [vmem:[#allocation7 + $0x80] sm:$0x1]
    %v262 = vlaneseq
    %v263 = vshrl.u32 %v262, 7
    %v264 = vsub.s32 0, %v263
    %v265 = vrot.slane %v261, %v264
    %266 = vmatprep.subr.mxu0 0.0
    %267 = vmatpush1.msra.mxu0 %v260
    %268 = vmatprep.subr.mxu0 0.0
    %269 = vmatpush1.msra.mxu0 %v259
    %270 = vmatprep.subr.mxu0 0.0
    %271 = vmatpush1.msra.mxu0 %v258
    %272 = vmatprep.subr.mxu0 0.0
    %273 = vmatpush1.msra.mxu0 %v257
    %274 = vmatprep.subr.mxu0 0.0
    %275 = vmatpush1.msra.mxu0 %v256
    %276 = vmatprep.subr.mxu0 0.0
    %277 = vmatpush1.msra.mxu0 %v255
    %278 = vmatprep.subr.mxu0 0.0
    %279 = vmatpush1.msra.mxu0 %v254
    %280 = vmatprep.subr.mxu0 0.0
    %281 = vmatpush1.msra.mxu0 %v253
    %282 = vmatprep.subr.mxu0 0.0
    %283 = vmatpush1.msra.mxu0 %v252
    %284 = vmatprep.subr.mxu0 0.0
    %285 = vmatpush1.msra.mxu0 %v251
    %286 = vmatprep.subr.mxu0 0.0
    %287 = vmatpush1.msra.mxu0 %v250
    %288 = vmatprep.subr.mxu0 0.0
    %289 = vmatpush1.msra.mxu0 %v249
    %290 = vmatprep.subr.mxu0 0.0
    %291 = vmatpush1.msra.mxu0 %v248
    %292 = vmatprep.subr.mxu0 0.0
    %293 = vmatpush1.msra.mxu0 %v247
    %294 = vmatprep.subr.mxu0 0.0
    %295 = vmatpush1.msra.mxu0 %v246
    %296 = vmatprep.subr.mxu0 0.0
    %297 = vmatpush1.msra.mxu0 %v245
    %298 = vmatprep.subr.mxu0 0.0
    %299 = vmatpush2.msra.mxu0 0.0
    %300 = vmatprep.subr.mxu0 0.0
    %301 = vmatpush2.msra.mxu0 0.0
    %302 = vmatprep.subr.mxu0 0.0
    %303 = vmatpush2.msra.mxu0 0.0
    %304 = vmatprep.subr.mxu0 0.0
    %305 = vmatpush2.msra.mxu0 0.0
    %306 = vmatprep.subr.mxu0 0.0
    %307 = vmatpush2.msra.mxu0 0.0
    %308 = vmatprep.subr.mxu0 0.0
    %309 = vmatpush2.msra.mxu0 0.0
    %310 = vmatprep.subr.mxu0 0.0
    %311 = vmatpush2.msra.mxu0 0.0
    %312 = vmatprep.subr.mxu0 0.0
    %313 = vmatpush2.msra.mxu0 0.0
    %314 = vmatprep.subr.mxu0 0.0
    %315 = vmatpush2.msra.mxu0 0.0
    %316 = vmatprep.subr.mxu0 0.0
    %317 = vmatpush2.msra.mxu0 0.0
    %318 = vmatprep.subr.mxu0 0.0
    %319 = vmatpush2.msra.mxu0 0.0
    %320 = vmatprep.subr.mxu0 0.0
    %321 = vmatpush2.msra.mxu0 0.0
    %322 = vmatprep.subr.mxu0 0.0
    %323 = vmatpush2.msra.mxu0 0.0
    %324 = vmatprep.subr.mxu0 0.0
    %325 = vmatpush2.msra.mxu0 0.0
    %326 = vmatprep.subr.mxu0 0.0
    %327 = vmatpush2.msra.mxu0 0.0
    %328 = vmatprep.subr.mxu0 0.0
    %329 = vmatpush2.msra.mxu0 0.0
    %330 = vmatprep.mubr.f32.mxu0 0.0
    %331 = vmatmul.mubr.f32.gmra.mxu0 %v244
    %v332 = vpop.f32.mrf.mxu0
    %v333 = vadd.f32 %v265, %v332
    %v334 = vpop.f32.mrf.mxu0
    %335 = vdwg.mxu0
    %336 = vst [vmem:[%s4] sm:$0xff] %v333
    // Predicated region
    $region34: #{network_forward.1} parent=1 // pred_check
      _
    $region35: #{network_forward.1} parent=1 // pred_check_branch
      %338 = sbr.rel (0) target = $region37
    $region36: #{network_forward.1} parent=1 // pred_region
      _
    $region37: #{network_forward.1} parent=1 // pred_fallthru
      _
    // Predicated region
    $region38: #{network_forward.1} parent=1 // pred_check
      _
    $region39: #{network_forward.1} parent=1 // pred_check_branch
      %340 = sbr.rel (0) target = $region41
    $region40: #{network_forward.1} parent=1 // pred_region
      _
    $region41: #{network_forward.1} parent=1 // pred_fallthru
      _
    %341 = vsyncpa [#allocation3], 1
    %342 = vsyncpa [#allocation5], 1
    %343 = vsyncpa [#allocation8], 1

</llo_original>
